<compile_context>
chip_gen: v7x
topology: tpu7x:2x2x1
jax: 0.10.0
libtpu: 0.0.40
codegen_flags: <defaults>
</compile_context>

<pallas_src>
import jax
import jax.numpy as jnp
from jax.experimental import pallas as pl
from jax.experimental.pallas import tpu as pltpu

_LANES = 128
_SUBLANES = 8


def _cdiv(a, b):
    return -(-a // b)


def _jeffreys_kernel(mu1_ref, var1_ref, mu2_ref, var2_ref, out_ref):
    j = pl.program_id(1)  # reduction ("arbitrary") axis

    @pl.when(j == 0)
    def _():
        out_ref[...] = jnp.zeros_like(out_ref)

    mu1 = mu1_ref[...].astype(jnp.float32)
    mu2 = mu2_ref[...].astype(jnp.float32)
    # clamp(min=1e-6) on the *variance*, exactly like the PyTorch forward.
    v1 = jnp.maximum(var1_ref[...].astype(jnp.float32), 1e-6)
    v2 = jnp.maximum(var2_ref[...].astype(jnp.float32), 1e-6)

    d2 = (mu1 - mu2) * (mu1 - mu2)
    # kl12 + kl21 with the log(std) terms cancelled exactly; 0.5 factored out.
    val = 0.5 * ((v1 + d2) / v2 + (v2 + d2) / v1) - 1.0

    rows = val.shape[0]
    # Sublane-group partial sum: (rows,128) -> (rows/8, 8, 128) -> (8, 128).
    # Layout-preserving reshape; reduction over the leading axis is plain
    # vreg-wise VPU adds (no cross-lane XLU work inside the loop).
    out_ref[...] += jnp.sum(
        val.reshape(rows // _SUBLANES, _SUBLANES, _LANES), axis=0)


def jeffreys(params1, params2, *, tile_rows: int = 4096,
             min_pallas_elems: int = 65536):
    """params1 = (mu1, var1), params2 = (mu2, var2); returns scalar float32."""
    mu1, var1 = params1
    mu2, var2 = params2
    assert mu1.shape == var1.shape == mu2.shape == var2.shape
    n = mu1.size
    assert n > 0
    inv_n = jnp.float32(1.0 / n)

    if n < min_pallas_elems:
        # Small-input fast path: pallas_call fixed cost would dominate here.
        m1 = jnp.ravel(mu1).astype(jnp.float32)
        m2 = jnp.ravel(mu2).astype(jnp.float32)
        v1 = jnp.maximum(jnp.ravel(var1).astype(jnp.float32), 1e-6)
        v2 = jnp.maximum(jnp.ravel(var2).astype(jnp.float32), 1e-6)
        d2 = (m1 - m2) * (m1 - m2)
        val = 0.5 * ((v1 + d2) / v2 + (v2 + d2) / v1) - 1.0
        return jnp.sum(val) * inv_n

    # Lane-dense layout: everything becomes (-1, 128).
    rows = _cdiv(n, _LANES)
    rows_up8 = _cdiv(rows, _SUBLANES) * _SUBLANES

    # Decide the megacore split first: both TensorCores get work whenever
    # there are at least two sublane tiles (v7x); no-op on single-TC chips.
    n_split = 2 if rows_up8 >= 2 * _SUBLANES else 1

    # Tile rows: multiple of 8 sublanes, no larger than one split's share.
    tile_rows = max(
        _SUBLANES,
        (min(tile_rows, _cdiv(rows_up8, n_split)) // _SUBLANES) * _SUBLANES)
    steps = _cdiv(rows_up8, n_split * tile_rows)
    rows_padded = n_split * steps * tile_rows
    pad = rows_padded * _LANES - n

    def _prep(x, pad_val):
        x = jnp.ravel(x)
        if pad:
            x = jnp.concatenate([x, jnp.full((pad,), pad_val, x.dtype)])
        return x.reshape(rows_padded, _LANES)

    # Padding with mu=0, var=1 => (1+0)/2 + (1+0)/2 - 1 == 0 contribution.
    mu1_p = _prep(mu1, 0)
    v1_p = _prep(var1, 1)
    mu2_p = _prep(mu2, 0)
    v2_p = _prep(var2, 1)

    in_spec = pl.BlockSpec((tile_rows, _LANES), lambda i, j: (i * steps + j, 0))
    # Lane-dense (8,128) accumulator per split, resident across the j axis.
    out_spec = pl.BlockSpec((_SUBLANES, _LANES), lambda i, j: (i, 0))

    # 4 inputs x 2 buffers x tile bytes, plus headroom for the output/scratch.
    vmem_limit = 4 * 2 * tile_rows * _LANES * 4 + (4 << 20)

    partials = pl.pallas_call(
        _jeffreys_kernel,
        out_shape=jax.ShapeDtypeStruct((n_split * _SUBLANES, _LANES),
                                       jnp.float32),
        grid=(n_split, steps),
        in_specs=[in_spec, in_spec, in_spec, in_spec],
        out_specs=out_spec,
        compiler_params=pltpu.CompilerParams(
            dimension_semantics=("parallel", "arbitrary"),
            vmem_limit_bytes=vmem_limit,
            allow_input_fusion=[True, True, True, True],
        ),
    )(mu1_p, v1_p, mu2_p, v2_p)

    # Combine the lane-wise partial sums and apply the mean normalisation.
    return jnp.sum(partials) * inv_n


def _jeffreys_ref(params1, params2):
    """Pure-JAX reference mirroring torch.distributions semantics (with logs)."""
    mu1, var1 = params1
    mu2, var2 = params2
    v1 = jnp.maximum(var1.astype(jnp.float32), 1e-6)
    v2 = jnp.maximum(var2.astype(jnp.float32), 1e-6)
    m1 = mu1.astype(jnp.float32)
    m2 = mu2.astype(jnp.float32)
    log_s1 = 0.5 * jnp.log(v1)
    log_s2 = 0.5 * jnp.log(v2)
    d2 = (m1 - m2) ** 2
    kl12 = log_s2 - log_s1 + (v1 + d2) / (2.0 * v2) - 0.5
    kl21 = log_s1 - log_s2 + (v2 + d2) / (2.0 * v1) - 0.5
    return kl12.mean() + kl21.mean()


def _rand_case(seed, shape):
    k1, k2, k3, k4 = jax.random.split(jax.random.PRNGKey(seed), 4)
    mu1 = jax.random.normal(k1, shape, dtype=jnp.float32)
    mu2 = jax.random.normal(k2, shape, dtype=jnp.float32)
    var1 = jax.random.uniform(k3, shape, dtype=jnp.float32,
                              minval=0.1, maxval=2.0)
    var2 = jax.random.uniform(k4, shape, dtype=jnp.float32,
                              minval=0.1, maxval=2.0)
    return (mu1, var1), (mu2, var2)


if __name__ == "__main__":
    # Small VAE-latent shape (matches the module's typical use): batch=8,
    # latent=32. Seeded with PRNGKey(0).
    p1, p2 = _rand_case(0, (8, 32))
    ref = _jeffreys_ref(p1, p2)

    # Default path (small-input fast path).
    out_fast = jax.block_until_ready(jeffreys(p1, p2))
    assert jnp.allclose(out_fast, ref, rtol=1e-5, atol=1e-5), (out_fast, ref)

    # Force the Pallas kernel on the same small input (exercises the padded,
    # single-split, single-step path).
    out_kern = jax.block_until_ready(jeffreys(p1, p2, min_pallas_elems=0))
    assert jnp.allclose(out_kern, ref, rtol=1e-5, atol=1e-5), (out_kern, ref)

    # Ragged medium case: pallas path with tail padding fused into the DMA,
    # 2-way parallel split.
    q1, q2 = _rand_case(1, (1000, 77))
    out_r = jax.block_until_ready(jeffreys(q1, q2))
    ref_r = _jeffreys_ref(q1, q2)
    assert jnp.allclose(out_r, ref_r, rtol=1e-4, atol=1e-4), (out_r, ref_r)

    # Larger case with a small tile: exercises the multi-step accumulator
    # (j axis) on both splits, pad == 0.
    r1, r2 = _rand_case(2, (2048, 160))
    out_b = jax.block_until_ready(jeffreys(r1, r2, tile_rows=256))
    ref_b = _jeffreys_ref(r1, r2)
    assert jnp.allclose(out_b, ref_b, rtol=1e-4, atol=1e-4), (out_b, ref_b)

    print("KERNEL_OK")
</pallas_src>

<mosaic_0001>
module attributes {stable_mosaic.version = 11 : i64} {
  func.func @_jeffreys_kernel(%arg0: i32, %arg1: i32, %arg2: memref<8x128xf32, #tpu.memory_space<vmem>>, %arg3: memref<8x128xf32, #tpu.memory_space<vmem>>, %arg4: memref<8x128xf32, #tpu.memory_space<vmem>>, %arg5: memref<8x128xf32, #tpu.memory_space<vmem>>, %arg6: memref<8x128xf32, #tpu.memory_space<vmem>>) attributes {dimension_semantics = [#tpu.dimension_semantics<parallel>, #tpu.dimension_semantics<arbitrary>], iteration_bounds = array<i64: 1, 1>, scalar_prefetch = 0 : i64, scratch_operands = 0 : i64, tpu.core_type = #tpu.core_type<tc>, window_params = [{transform_indices = @transform_0, window_bounds = array<i64: 8, 128>}, {transform_indices = @transform_1, window_bounds = array<i64: 8, 128>}, {transform_indices = @transform_2, window_bounds = array<i64: 8, 128>}, {transform_indices = @transform_3, window_bounds = array<i64: 8, 128>}, {transform_indices = @transform_4, window_bounds = array<i64: 8, 128>}]} {
    %c0_i32 = arith.constant 0 : i32
    %0 = arith.cmpi eq, %arg1, %c0_i32 : i32
    %1 = arith.extui %0 : i1 to i32
    %c0_i32_0 = arith.constant 0 : i32
    %2 = arith.cmpi ne, %1, %c0_i32_0 : i32
    scf.if %2 {
      %cst_16 = arith.constant 0.000000e+00 : f32
      %28 = vector.broadcast %cst_16 : f32 to vector<8x128xf32>
      %c0_17 = arith.constant 0 : index
      %c0_18 = arith.constant 0 : index
      %29 = vector.load %arg6[%c0_17, %c0_18] : memref<8x128xf32, #tpu.memory_space<vmem>>, vector<8x128xf32>
      tpu.vector_store %arg6[%c0_17, %c0_18], %28 {strides = array<i32>} : memref<8x128xf32, #tpu.memory_space<vmem>>, vector<8x128xf32>,
    } else {
    }
    %c0 = arith.constant 0 : index
    %c0_1 = arith.constant 0 : index
    %3 = vector.load %arg2[%c0, %c0_1] : memref<8x128xf32, #tpu.memory_space<vmem>>, vector<8x128xf32>
    %c0_2 = arith.constant 0 : index
    %c0_3 = arith.constant 0 : index
    %4 = vector.load %arg4[%c0_2, %c0_3] : memref<8x128xf32, #tpu.memory_space<vmem>>, vector<8x128xf32>
    %c0_4 = arith.constant 0 : index
    %c0_5 = arith.constant 0 : index
    %5 = vector.load %arg3[%c0_4, %c0_5] : memref<8x128xf32, #tpu.memory_space<vmem>>, vector<8x128xf32>
    %cst = arith.constant 9.99999997E-7 : f32
    %6 = vector.broadcast %cst : f32 to vector<8x128xf32>
    %7 = arith.maximumf %5, %6 : vector<8x128xf32>
    %c0_6 = arith.constant 0 : index
    %c0_7 = arith.constant 0 : index
    %8 = vector.load %arg5[%c0_6, %c0_7] : memref<8x128xf32, #tpu.memory_space<vmem>>, vector<8x128xf32>
    %cst_8 = arith.constant 9.99999997E-7 : f32
    %9 = vector.broadcast %cst_8 : f32 to vector<8x128xf32>
    %10 = arith.maximumf %8, %9 : vector<8x128xf32>
    %11 = arith.subf %3, %4 : vector<8x128xf32>
    %12 = arith.subf %3, %4 : vector<8x128xf32>
    %13 = arith.mulf %11, %12 : vector<8x128xf32>
    %14 = arith.addf %7, %13 : vector<8x128xf32>
    %15 = arith.divf %14, %10 : vector<8x128xf32>
    %16 = arith.addf %10, %13 : vector<8x128xf32>
    %17 = arith.divf %16, %7 : vector<8x128xf32>
    %18 = arith.addf %15, %17 : vector<8x128xf32>
    %cst_9 = arith.constant 5.000000e-01 : f32
    %19 = vector.broadcast %cst_9 : f32 to vector<8x128xf32>
    %20 = arith.mulf %19, %18 : vector<8x128xf32>
    %cst_10 = arith.constant 1.000000e+00 : f32
    %21 = vector.broadcast %cst_10 : f32 to vector<8x128xf32>
    %22 = arith.subf %20, %21 : vector<8x128xf32>
    %c0_11 = arith.constant 0 : index
    %c0_12 = arith.constant 0 : index
    %23 = vector.load %arg6[%c0_11, %c0_12] : memref<8x128xf32, #tpu.memory_space<vmem>>, vector<8x128xf32>
    %24 = vector.shape_cast %22 : vector<8x128xf32> to vector<1x8x128xf32>
    %cst_13 = arith.constant dense<0.000000e+00> : vector<8x128xf32>
    %25 = vector.multi_reduction <add>, %24, %cst_13 [0] : vector<1x8x128xf32> to vector<8x128xf32>
    %26 = arith.addf %23, %25 : vector<8x128xf32>
    %c0_14 = arith.constant 0 : index
    %c0_15 = arith.constant 0 : index
    %27 = vector.load %arg6[%c0_14, %c0_15] : memref<8x128xf32, #tpu.memory_space<vmem>>, vector<8x128xf32>
    tpu.vector_store %arg6[%c0_14, %c0_15], %26 {strides = array<i32>} : memref<8x128xf32, #tpu.memory_space<vmem>>, vector<8x128xf32>,
    return
  }
  func.func @transform_0(%arg0: i32, %arg1: i32) -> (i32, i32) {
    %c1_i32 = arith.constant 1 : i32
    %0 = arith.muli %arg0, %c1_i32 : i32
    %1 = arith.addi %0, %arg1 : i32
    %c0_i32 = arith.constant 0 : i32
    %c0_i32_0 = arith.constant 0 : i32
    return %1, %c0_i32 : i32, i32
  }
  func.func @transform_1(%arg0: i32, %arg1: i32) -> (i32, i32) {
    %c1_i32 = arith.constant 1 : i32
    %0 = arith.muli %arg0, %c1_i32 : i32
    %1 = arith.addi %0, %arg1 : i32
    %c0_i32 = arith.constant 0 : i32
    %c0_i32_0 = arith.constant 0 : i32
    return %1, %c0_i32 : i32, i32
  }
  func.func @transform_2(%arg0: i32, %arg1: i32) -> (i32, i32) {
    %c1_i32 = arith.constant 1 : i32
    %0 = arith.muli %arg0, %c1_i32 : i32
    %1 = arith.addi %0, %arg1 : i32
    %c0_i32 = arith.constant 0 : i32
    %c0_i32_0 = arith.constant 0 : i32
    return %1, %c0_i32 : i32, i32
  }
  func.func @transform_3(%arg0: i32, %arg1: i32) -> (i32, i32) {
    %c1_i32 = arith.constant 1 : i32
    %0 = arith.muli %arg0, %c1_i32 : i32
    %1 = arith.addi %0, %arg1 : i32
    %c0_i32 = arith.constant 0 : i32
    %c0_i32_0 = arith.constant 0 : i32
    return %1, %c0_i32 : i32, i32
  }
  func.func @transform_4(%arg0: i32, %arg1: i32) -> (i32, i32) {
    %c0_i32 = arith.constant 0 : i32
    %c0_i32_0 = arith.constant 0 : i32
    return %arg0, %c0_i32 : i32, i32
  }
}

</mosaic_0001>

<llo_original>
// kernel: tpu_custom_call.1
$region0: #{tpu_custom_call.1}
  #allocation0 [shape = 'u32[]', space=smem, size = 0x4, offset = 0x4, fixed_abs, tag = 'smem constant byte address 0x4 - core index']
  #allocation1 [shape = 'u32[144,128]{1,0:T(1,128)}', space=vmem, size = 0x12000, scoped, tag = 'internal scratch']
  %s0 = inlined_call_operand.hbm [shape: f32[8,128], index: 0, kind: input, shape index: {}]
  %s1 = inlined_call_operand.hbm [shape: f32[8,128], index: 1, kind: input, shape index: {}]
  %s2 = inlined_call_operand.hbm [shape: f32[8,128], index: 2, kind: input, shape index: {}]
  %s3 = inlined_call_operand.vmem [shape: f32[8,128], index: 3, kind: input, shape index: {}]
  %s4 = inlined_call_operand.hbm [shape: f32[8,128], index: 4, kind: output, shape index: {}]
  %s5 = sld [smem:[#allocation0]]
  $region42: #{tpu_custom_call.1} parent=0
    _
  %s7 = ssub.s32 1, %s5
  %s8 = scalar_select 0, %s7, %s5
  $region1: #{tpu_custom_call.1} parent=0
    #allocation2 [shape = 'u8[4096]{0}', space=vmem, size = 0x1000, scoped, tag = 'input window, operand 0, single buffered']
    #allocation3 [shape = 's32[1]{0}', space=sflag, size = 0x4, scoped, tag = 'scoped memory for tpu_custom_call.1']
    #allocation4 [shape = 's32[1]{0}', space=sflag, size = 0x4, scoped, tag = 'scoped memory for tpu_custom_call.1']
    #allocation5 [shape = 'u8[4096]{0}', space=vmem, size = 0x1000, scoped, tag = 'input window, operand 1, single buffered']
    #allocation6 [shape = 's32[1]{0}', space=sflag, size = 0x4, scoped, tag = 'scoped memory for tpu_custom_call.1']
    #allocation7 [shape = 'u8[4096]{0}', space=vmem, size = 0x1000, scoped, tag = 'input window, operand 2, single buffered']
    #allocation8 [shape = 'u8[4096]{0}', space=vmem, size = 0x1000, scoped, tag = 'output window, operand 0, single buffered']
    %9 = vsyncpa [#allocation3], 0
    %10 = vsyncpa [#allocation6], 0
    %11 = vsyncpa [#allocation4], 0
    // Predicated region
    $region2: #{tpu_custom_call.1} parent=1 // pred_check
      _
    $region3: #{tpu_custom_call.1} parent=1 // pred_check_branch
      %13 = sbr.rel (0) target = $region5
    $region4: #{tpu_custom_call.1} parent=1 // pred_region
      %s14 = sadd.s32 0, 0
      %s16 = ssub.s32 128, 128
      %17 = vsyncadd [#allocation3], %s16
      %s18 = smul.addr %s14, 128
      %s19 = scalar_lea.hbm %s0, %s18
      %s21 = sshll.u32 [#allocation2], 4
      %s22 = int_to_ptr.vmem [resolvable:$true] %s21
      %24 = dma.hbm_to_vmem [thread:$0]  %s19, 128, %s22, [#allocation3]
    $region5: #{tpu_custom_call.1} parent=1 // pred_fallthru
      _
    // Predicated region
    $region6: #{tpu_custom_call.1} parent=1 // pred_check
      _
    $region7: #{tpu_custom_call.1} parent=1 // pred_check_branch
      %26 = sbr.rel (0) target = $region9
    $region8: #{tpu_custom_call.1} parent=1 // pred_region
      %s27 = sadd.s32 0, 0
      %s29 = ssub.s32 128, 128
      %30 = vsyncadd [#allocation6], %s29
      %s31 = smul.addr %s27, 128
      %s32 = scalar_lea.hbm %s1, %s31
      %s34 = sshll.u32 [#allocation5], 4
      %s35 = int_to_ptr.vmem [resolvable:$true] %s34
      %37 = dma.hbm_to_vmem [thread:$0]  %s32, 128, %s35, [#allocation6]
    $region9: #{tpu_custom_call.1} parent=1 // pred_fallthru
      _
    // Predicated region
    $region10: #{tpu_custom_call.1} parent=1 // pred_check
      _
    $region11: #{tpu_custom_call.1} parent=1 // pred_check_branch
      %39 = sbr.rel (0) target = $region13
    $region12: #{tpu_custom_call.1} parent=1 // pred_region
      %s40 = sadd.s32 0, 0
      %s42 = ssub.s32 128, 128
      %43 = vsyncadd [#allocation6], %s42
      %s44 = smul.addr %s40, 128
      %s45 = scalar_lea.hbm %s2, %s44
      %s47 = sshll.u32 [#allocation7], 4
      %s48 = int_to_ptr.vmem [resolvable:$true] %s47
      %50 = dma.hbm_to_vmem [thread:$0]  %s45, 128, %s48, [#allocation6]
    $region13: #{tpu_custom_call.1} parent=1 // pred_fallthru
      _
    // Predicated region
    $region14: #{tpu_custom_call.1} parent=1 // pred_check
      _
    $region15: #{tpu_custom_call.1} parent=1 // pred_check_branch
      %52 = sbr.rel (0) target = $region17
    $region16: #{tpu_custom_call.1} parent=1 // pred_region
      %s53 = sadd.s32 0, 0
      %p54 = scmp.lt.s32.totalorder %s53, 0
      %s55 = scalar_select %p54, %s53, 0
      %s56 = smul.addr %s55, 8
      %s57 = scalar_lea.vmem %s3, %s56
      %s58 = sadd.s32 0, 0
    $region17: #{tpu_custom_call.1} parent=1 // pred_fallthru
      _
    // Predicated region
    $region18: #{tpu_custom_call.1} parent=1 // pred_check
      _
    $region19: #{tpu_custom_call.1} parent=1 // pred_check_branch
      %60 = sbr.rel (0) target = $region21
    $region20: #{tpu_custom_call.1} parent=1 // pred_region
      %61 = dma.done [#allocation3], 128
    $region21: #{tpu_custom_call.1} parent=1 // pred_fallthru
      _
    // Predicated region
    $region22: #{tpu_custom_call.1} parent=1 // pred_check
      _
    $region23: #{tpu_custom_call.1} parent=1 // pred_check_branch
      %63 = sbr.rel (0) target = $region25
    $region24: #{tpu_custom_call.1} parent=1 // pred_region
      %64 = dma.done [#allocation6], 128
    $region25: #{tpu_custom_call.1} parent=1 // pred_fallthru
      _
    // Predicated region
    $region26: #{tpu_custom_call.1} parent=1 // pred_check
      _
    $region27: #{tpu_custom_call.1} parent=1 // pred_check_branch
      %66 = sbr.rel (0) target = $region29
    $region28: #{tpu_custom_call.1} parent=1 // pred_region
      %67 = dma.done [#allocation6], 128
    $region29: #{tpu_custom_call.1} parent=1 // pred_fallthru
      _
    %s68 = sadd.s32 0, 0
    %p69 = scmp.lt.s32.totalorder %s68, 0
    %s70 = scalar_select %p69, %s68, 0
    %s71 = smul.addr %s70, 8
    %s72 = scalar_lea.vmem %s3, %s71
    %s73 = sadd.s32 0, 0
    %s74 = sadd.s32 0, 0
    %s75 = sadd.s32 0, 0
    %s76 = sadd.s32 0, 0
    %p77 = scmp.lt.s32.totalorder %s76, 0
    %s78 = scalar_select %p77, %s76, 0
    %s79 = smul.addr %s78, 8
    %s80 = scalar_lea.vmem %s3, %s79
    %s81 = sadd.s32 0, 0
    %p82 = scmp.eq.s32.totalorder 0, 0
    // Predicated region
    $region30: #{tpu_custom_call.1} parent=1 // pred_check
      %p83 = pneg %p82
    $region31: #{tpu_custom_call.1} parent=1 // pred_check_branch
      %85 = sbr.rel (%p83) target = $region33
    $region32: #{tpu_custom_call.1} parent=1 // pred_region
      %86 = vst [vmem:[#allocation8] sm:$0xff] 0.0
    $region33: #{tpu_custom_call.1} parent=1 // pred_fallthru
      _
    %v87 = vld [vmem:[#allocation2] sm:$0xff]
    %v88 = vld [vmem:[#allocation7] sm:$0xff]
    %v89 = vld [vmem:[#allocation5] sm:$0xff]
    %v90 = vmax.f32 %v89, 1e-06
    %v91 = vld [vmem:[%s80] sm:$0xff]
    %v92 = vmax.f32 %v91, 1e-06
    %v93 = vsub.f32 %v87, %v88
    %v94 = vmul.f32 %v93, %v93
    %v95 = vadd.f32 %v90, %v94
    %v96 = vrcp.pop %v92
    %v97 = vmul.f32 %v95, %v96
    %v98 = vadd.f32 %v92, %v94
    %v99 = vrcp.pop %v90
    %v100 = vmul.f32 %v98, %v99
    %v101 = vadd.f32 %v97, %v100
    %v102 = vmul.f32 %v101, 0.5
    %v103 = vsub.f32 %v102, 1.0
    %v104 = vld [vmem:[#allocation8] sm:$0xff]
    %v105 = vadd.f32 %v103, 0.0
    %v106 = vadd.f32 %v104, %v105
    %107 = vst [vmem:[#allocation8] sm:$0xff] %v106
    // Predicated region
    $region34: #{tpu_custom_call.1} parent=1 // pred_check
      _
    $region35: #{tpu_custom_call.1} parent=1 // pred_check_branch
      %109 = sbr.rel (0) target = $region37
    $region36: #{tpu_custom_call.1} parent=1 // pred_region
      %s111 = ssub.s32 128, 128
      %112 = vsyncadd [#allocation4], %s111
      %s114 = sshll.u32 [#allocation8], 4
      %s115 = int_to_ptr.vmem [resolvable:$true] %s114
      %117 = dma.vmem_to_hbm [thread:$0]  %s115, 128, %s4, [#allocation4]
    $region37: #{tpu_custom_call.1} parent=1 // pred_fallthru
      _
    // Predicated region
    $region38: #{tpu_custom_call.1} parent=1 // pred_check
      _
    $region39: #{tpu_custom_call.1} parent=1 // pred_check_branch
      %119 = sbr.rel (0) target = $region41
    $region40: #{tpu_custom_call.1} parent=1 // pred_region
      %120 = dma.done [#allocation4], 128
    $region41: #{tpu_custom_call.1} parent=1 // pred_fallthru
      _
    %121 = vsyncpa [#allocation3], 1
    %122 = vsyncpa [#allocation6], 1
    %123 = vsyncpa [#allocation4], 1

</llo_original>
